<compile_context>
chip_gen: v6e
topology: v6e:2x2x1
jax: 0.10.0
libtpu: 0.0.40
codegen_flags: <defaults>
</compile_context>

<pallas_src>
import functools

import jax
import jax.numpy as jnp
from jax.experimental import pallas as pl
from jax.experimental.pallas import tpu as pltpu


# --------------------------------------------------------------------------
# hardware query
# --------------------------------------------------------------------------
def _tpu_vmem_bytes():
    """Physical VMEM per core (128 MiB v5e/v6e, 64 MiB v7x); safe fallback."""
    try:
        return int(pltpu.get_tpu_info().vmem_capacity_bytes)
    except Exception:
        return 128 * 1024 * 1024


# --------------------------------------------------------------------------
# kernel
# --------------------------------------------------------------------------
def _fcblock_kernel(*refs, eps, prenorm, identity, residual, leaky,
                    neg_slope, mxu_dtype):
    # prenorm / identity path: (x, w, b, o)        -- LN affine already folded
    # postnorm path:           (x, w, b, lnw, lnb, o)
    if prenorm or identity:
        x_ref, w_ref, b_ref, o_ref = refs
        lnw_ref = lnb_ref = None
    else:
        x_ref, w_ref, b_ref, lnw_ref, lnb_ref, o_ref = refs

    xf = x_ref[...].astype(jnp.float32)          # LN math kept in f32

    def _ln_no_affine(z):
        # fused single pass: sum and sum-of-squares, var = E[z^2] - mean^2
        n = z.shape[-1]
        s = jnp.sum(z, axis=-1, keepdims=True)
        s2 = jnp.sum(z * z, axis=-1, keepdims=True)
        mean = s * (1.0 / n)
        var = jnp.maximum(s2 * (1.0 / n) - mean * mean, 0.0)   # clamp cancellation
        return (z - mean) * jax.lax.rsqrt(var + eps)

    if prenorm and not identity:
        h = _ln_no_affine(xf)                    # affine folded into w/b (wrapper)
    else:
        h = xf

    out = jnp.dot(h.astype(mxu_dtype), w_ref[...],
                  preferred_element_type=jnp.float32)
    out = out + b_ref[...].astype(jnp.float32)

    if (not prenorm) and (not identity):
        out = (_ln_no_affine(out) * lnw_ref[...].astype(jnp.float32)
               + lnb_ref[...].astype(jnp.float32))

    if residual:
        out = out + xf                           # PyTorch: act(x + out)

    if leaky:
        out = jnp.where(out >= 0, out, neg_slope * out)
    else:
        out = jnp.maximum(out, 0.0)

    # Dropout(p=0) is the identity.  TODO(synk): p>0 needs pltpu.prng_* masking.
    o_ref[...] = out.astype(o_ref.dtype)


# --------------------------------------------------------------------------
# tile selection (VMEM-budget aware, per-generation)
# --------------------------------------------------------------------------
def _pick_tm(rows, in_planes, planes, x_itemsize, mxu_itemsize, *,
             vmem_limit, two_cores):
    """Row-tile size: maximal within the VMEM budget, sublane-aligned."""
    sub = 8 if x_itemsize >= 4 else (16 if x_itemsize == 2 else 32)

    # Grid-invariant residents (single-buffered): weight + bias + LN params.
    resident = in_planes * planes * mxu_itemsize + 8 * 4 * planes
    budget = int(vmem_limit * 0.8) - resident
    if budget <= 0:
        # TODO(synk): K/N-tiled reduction grid for very large weights.
        raise NotImplementedError(
            "FCBlock weight does not fit in VMEM; K/N tiling not implemented")

    # Double-buffered x / out tiles plus f32 working temporaries per row.
    per_row = (2 * (in_planes + planes) * x_itemsize
               + 4 * 2 * (in_planes + planes))
    tm = budget // max(per_row, 1)
    tm = max(sub, min(tm, 8192))
    tm -= tm % sub

    rows_r = ((max(rows, 1) + sub - 1) // sub) * sub
    tm = min(tm, rows_r)
    tm = max(tm, sub)

    if two_cores:
        # v7x: the single "parallel" axis shards across 2 TensorCores; prefer an
        # even, balanced number of grid steps (>= 2) over one maximal tile.
        steps = pl.cdiv(rows, tm)
        if steps == 1 and rows > sub:
            steps = 2
        if steps % 2:
            steps += 1
        tm_bal = ((pl.cdiv(rows, steps) + sub - 1) // sub) * sub
        tm = max(sub, min(tm, tm_bal))
    return tm


# --------------------------------------------------------------------------
# wrapper (forward of FCBlock)
# --------------------------------------------------------------------------
def fc_block(x, fc_weight, fc_bias, ln_weight=None, ln_bias=None, *,
             eps=1e-5, prenorm=True, identity=False, residual=False,
             leaky=False, ch_mixer=False, neg_slope=0.01, mxu_dtype=None):
    """Forward pass of FCBlock with nn.LayerNorm norm and dropout p=0.

    x:          (..., in_planes)        (before the optional ch_mixer transpose)
    fc_weight:  (planes, in_planes)     (PyTorch Linear layout)
    fc_bias:    (planes,)
    ln_weight / ln_bias: (norm_dim,)    norm_dim = in_planes if prenorm else planes
                                        (ignored if identity=True)
    """
    if ch_mixer:
        # TODO(synk): fold this transpose into the kernel via BlockSpec +
        # in-VMEM transpose to avoid two extra HBM passes over the activations.
        x = jnp.swapaxes(x, -1, -2)

    planes, in_planes = fc_weight.shape
    if residual and in_planes != planes:
        raise ValueError("residual FCBlock requires in_planes == planes")

    if mxu_dtype is None:
        mxu_dtype = jnp.bfloat16 if x.dtype == jnp.bfloat16 else jnp.float32

    fc_weight = fc_weight.astype(jnp.float32)
    fc_bias = fc_bias.astype(jnp.float32)

    # ---- parameter prep (hoist to parameter-setup time in production) -------
    if prenorm and not identity:
        # Fold LN affine into the Linear:
        #   (x_hat * g + beta) @ W^T + b  ==  x_hat @ (g[:,None] * W^T) + (W @ beta + b)
        g = ln_weight.astype(jnp.float32)
        beta = ln_bias.astype(jnp.float32)
        w_in = (fc_weight * g[None, :]).T.astype(mxu_dtype)        # (in, planes)
        b_in = (fc_bias + fc_weight @ beta).reshape(1, planes)     # f32
    else:
        w_in = fc_weight.T.astype(mxu_dtype)                       # (in, planes)
        b_in = fc_bias.reshape(1, planes)

    ln_inputs = ()
    if (not prenorm) and (not identity):
        ln_inputs = (ln_weight.astype(jnp.float32).reshape(1, planes),
                     ln_bias.astype(jnp.float32).reshape(1, planes))

    lead = x.shape[:-1]
    x2d = x.reshape(-1, in_planes)
    rows = x2d.shape[0]

    vmem_phys = _tpu_vmem_bytes()
    vmem_limit = min(vmem_phys * 3 // 4, 100 * 1024 * 1024)   # ~96 MiB v5e/v6e, ~48 MiB v7x
    two_cores = vmem_phys <= 64 * 1024 * 1024                 # v7x proxy (2 TCs/chip)

    tm = _pick_tm(rows, in_planes, planes,
                  jnp.dtype(x.dtype).itemsize, jnp.dtype(mxu_dtype).itemsize,
                  vmem_limit=vmem_limit, two_cores=two_cores)
    grid = (pl.cdiv(rows, tm),)        # no jnp.pad: edge block is masked by Pallas

    kernel = functools.partial(
        _fcblock_kernel, eps=eps, prenorm=prenorm, identity=identity,
        residual=residual, leaky=leaky, neg_slope=neg_slope, mxu_dtype=mxu_dtype)

    def _invariant_spec(shape, single_buffer):
        if single_buffer:
            # grid-invariant operand: single-buffer it (default 2-deep pipeline
            # only duplicates its VMEM footprint).
            return pl.BlockSpec(shape, lambda i: (0, 0),
                                pipeline_mode=pl.Buffered(1))
        return pl.BlockSpec(shape, lambda i: (0, 0))

    def _run(single_buffer_invariants):
        in_specs = [pl.BlockSpec((tm, in_planes), lambda i: (i, 0)),
                    _invariant_spec((in_planes, planes), single_buffer_invariants),
                    _invariant_spec((1, planes), single_buffer_invariants)]
        for _ in ln_inputs:
            in_specs.append(_invariant_spec((1, planes), single_buffer_invariants))

        # TODO(synk): when planes < 128 the output store is lane-sparse
        # (vst.msk); keep planes a multiple of 128 in production.
        return pl.pallas_call(
            kernel,
            out_shape=jax.ShapeDtypeStruct((rows, planes), x.dtype),
            grid_spec=pltpu.PrefetchScalarGridSpec(
                num_scalar_prefetch=0,
                grid=grid,
                in_specs=in_specs,
                out_specs=pl.BlockSpec((tm, planes), lambda i: (i, 0)),
            ),
            compiler_params=pltpu.CompilerParams(
                dimension_semantics=("parallel",),
                vmem_limit_bytes=int(vmem_limit)),
        )(x2d, w_in, b_in, *ln_inputs)

    try:
        out2d = _run(True)
    except Exception:
        # Fallback for jax versions where single-buffered pipeline_mode
        # (pl.Buffered(1)) is not accepted by the TPU pipeliner.
        out2d = _run(False)

    out = out2d.reshape(*lead, planes)
    if ch_mixer:
        out = jnp.swapaxes(out, -1, -2)
    return out


# --------------------------------------------------------------------------
# pure-JAX reference (matches PyTorch forward semantics, dropout p=0)
# --------------------------------------------------------------------------
def _ref_fcblock(x, fc_w, fc_b, ln_w=None, ln_b=None, *, eps=1e-5, prenorm=True,
                 identity=False, residual=False, leaky=False, ch_mixer=False,
                 neg_slope=0.01):
    if ch_mixer:
        x = jnp.swapaxes(x, -1, -2)

    def ln(z):
        m = z.mean(-1, keepdims=True)
        v = ((z - m) ** 2).mean(-1, keepdims=True)
        return (z - m) / jnp.sqrt(v + eps) * ln_w + ln_b

    norm = (lambda z: z) if identity else ln
    if prenorm:
        out = norm(x) @ fc_w.T + fc_b
    else:
        out = norm(x @ fc_w.T + fc_b)
    if residual:
        out = x + out
    out = jnp.where(out >= 0, out, neg_slope * out) if leaky else jnp.maximum(out, 0.0)
    if ch_mixer:
        out = jnp.swapaxes(out, -1, -2)
    return out


# --------------------------------------------------------------------------
# test
# --------------------------------------------------------------------------
if __name__ == "__main__":
    key = jax.random.PRNGKey(0)
    k1, k2, k3 = jax.random.split(key, 3)

    B, S, Cin, Cout = 2, 8, 32, 32
    x = jax.random.normal(k1, (B, S, Cin), dtype=jnp.float32)
    fc_w = 0.1 * jax.random.normal(k2, (Cout, Cin), dtype=jnp.float32)
    fc_b = 0.1 * jax.random.normal(k3, (Cout,), dtype=jnp.float32)
    ln_w_in = 1.0 + 0.01 * jnp.arange(Cin, dtype=jnp.float32)
    ln_b_in = 0.001 * jnp.arange(Cin, dtype=jnp.float32)
    ln_w_out = 1.0 - 0.01 * jnp.arange(Cout, dtype=jnp.float32)
    ln_b_out = 0.002 * jnp.arange(Cout, dtype=jnp.float32)

    # 1) default config: prenorm LayerNorm -> Linear -> ReLU
    y = jax.block_until_ready(fc_block(x, fc_w, fc_b, ln_w_in, ln_b_in))
    ref = _ref_fcblock(x, fc_w, fc_b, ln_w_in, ln_b_in)
    assert y.shape == (B, S, Cout) and y.dtype == x.dtype
    assert jnp.allclose(y, ref, atol=1e-4, rtol=1e-4)

    # 2) residual + leaky variant
    y2 = jax.block_until_ready(
        fc_block(x, fc_w, fc_b, ln_w_in, ln_b_in, residual=True, leaky=True))
    ref2 = _ref_fcblock(x, fc_w, fc_b, ln_w_in, ln_b_in, residual=True, leaky=True)
    assert jnp.allclose(y2, ref2, atol=1e-4, rtol=1e-4)

    # 3) postnorm variant: Linear -> LayerNorm(planes) -> ReLU
    y3 = jax.block_until_ready(
        fc_block(x, fc_w, fc_b, ln_w_out, ln_b_out, prenorm=False))
    ref3 = _ref_fcblock(x, fc_w, fc_b, ln_w_out, ln_b_out, prenorm=False)
    assert jnp.allclose(y3, ref3, atol=1e-4, rtol=1e-4)

    # 4) ch_mixer variant: input is (B, C, L), fc applied along dim 1
    x_cm = jax.random.normal(jax.random.PRNGKey(1), (B, Cin, S), dtype=jnp.float32)
    y4 = jax.block_until_ready(
        fc_block(x_cm, fc_w, fc_b, ln_w_in, ln_b_in, ch_mixer=True))
    ref4 = _ref_fcblock(x_cm, fc_w, fc_b, ln_w_in, ln_b_in, ch_mixer=True)
    assert y4.shape == (B, Cout, S)
    assert jnp.allclose(y4, ref4, atol=1e-4, rtol=1e-4)

    # 5) identity=True variant: Linear -> ReLU (no norm)
    y5 = jax.block_until_ready(fc_block(x, fc_w, fc_b, identity=True))
    ref5 = _ref_fcblock(x, fc_w, fc_b, identity=True)
    assert jnp.allclose(y5, ref5, atol=1e-4, rtol=1e-4)

    # 6) bf16 activations -> bf16 MXU operands with f32 accumulation
    x_bf = x.astype(jnp.bfloat16)
    y6 = jax.block_until_ready(fc_block(x_bf, fc_w, fc_b, ln_w_in, ln_b_in))
    ref6 = _ref_fcblock(x_bf.astype(jnp.float32), fc_w, fc_b, ln_w_in, ln_b_in)
    assert y6.dtype == jnp.bfloat16
    assert jnp.allclose(y6.astype(jnp.float32), ref6, atol=5e-2, rtol=5e-2)

    print("KERNEL_OK")
</pallas_src>

<mosaic_0001>
module attributes {stable_mosaic.version = 11 : i64} {
  func.func @_fcblock_kernel(%arg0: i32, %arg1: memref<16x32xf32, #tpu.memory_space<vmem>>, %arg2: memref<32x32xf32, #tpu.memory_space<vmem>>, %arg3: memref<1x32xf32, #tpu.memory_space<vmem>>, %arg4: memref<16x32xf32, #tpu.memory_space<vmem>>) attributes {dimension_semantics = [#tpu.dimension_semantics<parallel>], iteration_bounds = array<i64: 1>, scalar_prefetch = 0 : i64, scratch_operands = 0 : i64, tpu.core_type = #tpu.core_type<tc>, window_params = [{transform_indices = @transform_0, window_bounds = array<i64: 16, 32>}, {pipeline_mode = #tpu.pipeline_mode<synchronous>, transform_indices = @transform_1, window_bounds = array<i64: 32, 32>}, {pipeline_mode = #tpu.pipeline_mode<synchronous>, transform_indices = @transform_2, window_bounds = array<i64: 1, 32>}, {transform_indices = @transform_3, window_bounds = array<i64: 16, 32>}]} {
    %c0 = arith.constant 0 : index
    %c0_0 = arith.constant 0 : index
    %0 = vector.load %arg1[%c0, %c0_0] : memref<16x32xf32, #tpu.memory_space<vmem>>, vector<16x32xf32>
    %cst = arith.constant dense<0.000000e+00> : vector<16xf32>
    %1 = vector.multi_reduction <add>, %0, %cst [1] : vector<16x32xf32> to vector<16xf32>
    %2 = vector.shape_cast %1 : vector<16xf32> to vector<16x1xf32>
    %3 = arith.mulf %0, %0 : vector<16x32xf32>
    %cst_1 = arith.constant dense<0.000000e+00> : vector<16xf32>
    %4 = vector.multi_reduction <add>, %3, %cst_1 [1] : vector<16x32xf32> to vector<16xf32>
    %5 = vector.shape_cast %4 : vector<16xf32> to vector<16x1xf32>
    %cst_2 = arith.constant 3.125000e-02 : f32
    %6 = vector.broadcast %cst_2 : f32 to vector<16x1xf32>
    %7 = arith.mulf %2, %6 : vector<16x1xf32>
    %cst_3 = arith.constant 3.125000e-02 : f32
    %8 = vector.broadcast %cst_3 : f32 to vector<16x1xf32>
    %9 = arith.mulf %5, %8 : vector<16x1xf32>
    %10 = arith.mulf %7, %7 : vector<16x1xf32>
    %11 = arith.subf %9, %10 : vector<16x1xf32>
    %cst_4 = arith.constant 0.000000e+00 : f32
    %12 = vector.broadcast %cst_4 : f32 to vector<16x1xf32>
    %13 = arith.maximumf %11, %12 : vector<16x1xf32>
    %14 = vector.broadcast %7 : vector<16x1xf32> to vector<16x32xf32>
    %15 = arith.subf %0, %14 : vector<16x32xf32>
    %cst_5 = arith.constant 9.99999974E-6 : f32
    %16 = vector.broadcast %cst_5 : f32 to vector<16x1xf32>
    %17 = arith.addf %13, %16 : vector<16x1xf32>
    %18 = math.rsqrt %17 : vector<16x1xf32>
    %19 = vector.broadcast %18 : vector<16x1xf32> to vector<16x32xf32>
    %20 = arith.mulf %15, %19 : vector<16x32xf32>
    %c0_6 = arith.constant 0 : index
    %c0_7 = arith.constant 0 : index
    %21 = vector.load %arg2[%c0_6, %c0_7] : memref<32x32xf32, #tpu.memory_space<vmem>>, vector<32x32xf32>
    %cst_8 = arith.constant dense<0.000000e+00> : vector<16x32xf32>
    %22 = tpu.matmul %20, %21, %cst_8 {dimension_numbers = #tpu.dot_dimension_numbers<[1], [0], [0], [1], [0, 0, 1, 1], [], []>} : vector<16x32xf32>, vector<32x32xf32>, vector<16x32xf32> -> vector<16x32xf32>
    %c0_9 = arith.constant 0 : index
    %c0_10 = arith.constant 0 : index
    %23 = vector.load %arg3[%c0_9, %c0_10] : memref<1x32xf32, #tpu.memory_space<vmem>>, vector<1x32xf32>
    %24 = vector.broadcast %23 : vector<1x32xf32> to vector<16x32xf32>
    %25 = arith.addf %22, %24 : vector<16x32xf32>
    %cst_11 = arith.constant 0.000000e+00 : f32
    %26 = vector.broadcast %cst_11 : f32 to vector<16x32xf32>
    %27 = arith.maximumf %25, %26 : vector<16x32xf32>
    %c0_12 = arith.constant 0 : index
    %c0_13 = arith.constant 0 : index
    %28 = vector.load %arg4[%c0_12, %c0_13] : memref<16x32xf32, #tpu.memory_space<vmem>>, vector<16x32xf32>
    tpu.vector_store %arg4[%c0_12, %c0_13], %27 {strides = array<i32>} : memref<16x32xf32, #tpu.memory_space<vmem>>, vector<16x32xf32>,
    return
  }
  func.func @transform_0(%arg0: i32) -> (i32, i32) {
    %c0_i32 = arith.constant 0 : i32
    %c0_i32_0 = arith.constant 0 : i32
    return %arg0, %c0_i32 : i32, i32
  }
  func.func @transform_1(%arg0: i32) -> (i32, i32) {
    %c0_i32 = arith.constant 0 : i32
    %c0_i32_0 = arith.constant 0 : i32
    %c0_i32_1 = arith.constant 0 : i32
    return %c0_i32, %c0_i32_0 : i32, i32
  }
  func.func @transform_2(%arg0: i32) -> (i32, i32) {
    %c0_i32 = arith.constant 0 : i32
    %c0_i32_0 = arith.constant 0 : i32
    %c0_i32_1 = arith.constant 0 : i32
    return %c0_i32, %c0_i32_0 : i32, i32
  }
  func.func @transform_3(%arg0: i32) -> (i32, i32) {
    %c0_i32 = arith.constant 0 : i32
    %c0_i32_0 = arith.constant 0 : i32
    return %arg0, %c0_i32 : i32, i32
  }
}

module attributes {stable_mosaic.version = 11 : i64} {
  func.func @_fcblock_kernel(%arg0: i32, %arg1: memref<16x32xf32, #tpu.memory_space<vmem>>, %arg2: memref<32x32xf32, #tpu.memory_space<vmem>>, %arg3: memref<1x32xf32, #tpu.memory_space<vmem>>, %arg4: memref<16x32xf32, #tpu.memory_space<vmem>>) attributes {dimension_semantics = [#tpu.dimension_semantics<parallel>], iteration_bounds = array<i64: 1>, scalar_prefetch = 0 : i64, scratch_operands = 0 : i64, tpu.core_type = #tpu.core_type<tc>, window_params = [{transform_indices = @transform_0, window_bounds = array<i64: 16, 32>}, {pipeline_mode = #tpu.pipeline_mode<synchronous>, transform_indices = @transform_1, window_bounds = array<i64: 32, 32>}, {pipeline_mode = #tpu.pipeline_mode<synchronous>, transform_indices = @transform_2, window_bounds = array<i64: 1, 32>}, {transform_indices = @transform_3, window_bounds = array<i64: 16, 32>}]} {
    %c0 = arith.constant 0 : index
    %c0_0 = arith.constant 0 : index
    %0 = vector.load %arg1[%c0, %c0_0] : memref<16x32xf32, #tpu.memory_space<vmem>>, vector<16x32xf32>
    %cst = arith.constant dense<0.000000e+00> : vector<16xf32>
    %1 = vector.multi_reduction <add>, %0, %cst [1] : vector<16x32xf32> to vector<16xf32>
    %2 = vector.shape_cast %1 : vector<16xf32> to vector<16x1xf32>
    %3 = arith.mulf %0, %0 : vector<16x32xf32>
    %cst_1 = arith.constant dense<0.000000e+00> : vector<16xf32>
    %4 = vector.multi_reduction <add>, %3, %cst_1 [1] : vector<16x32xf32> to vector<16xf32>
    %5 = vector.shape_cast %4 : vector<16xf32> to vector<16x1xf32>
    %cst_2 = arith.constant 3.125000e-02 : f32
    %6 = vector.broadcast %cst_2 : f32 to vector<16x1xf32>
    %7 = arith.mulf %2, %6 : vector<16x1xf32>
    %cst_3 = arith.constant 3.125000e-02 : f32
    %8 = vector.broadcast %cst_3 : f32 to vector<16x1xf32>
    %9 = arith.mulf %5, %8 : vector<16x1xf32>
    %10 = arith.mulf %7, %7 : vector<16x1xf32>
    %11 = arith.subf %9, %10 : vector<16x1xf32>
    %cst_4 = arith.constant 0.000000e+00 : f32
    %12 = vector.broadcast %cst_4 : f32 to vector<16x1xf32>
    %13 = arith.maximumf %11, %12 : vector<16x1xf32>
    %14 = vector.broadcast %7 : vector<16x1xf32> to vector<16x32xf32>
    %15 = arith.subf %0, %14 : vector<16x32xf32>
    %cst_5 = arith.constant 9.99999974E-6 : f32
    %16 = vector.broadcast %cst_5 : f32 to vector<16x1xf32>
    %17 = arith.addf %13, %16 : vector<16x1xf32>
    %18 = math.rsqrt %17 : vector<16x1xf32>
    %19 = vector.broadcast %18 : vector<16x1xf32> to vector<16x32xf32>
    %20 = arith.mulf %15, %19 : vector<16x32xf32>
    %c0_6 = arith.constant 0 : index
    %c0_7 = arith.constant 0 : index
    %21 = vector.load %arg2[%c0_6, %c0_7] : memref<32x32xf32, #tpu.memory_space<vmem>>, vector<32x32xf32>
    %cst_8 = arith.constant dense<0.000000e+00> : vector<16x32xf32>
    %22 = tpu.matmul %20, %21, %cst_8 {dimension_numbers = #tpu.dot_dimension_numbers<[1], [0], [0], [1], [0, 0, 1, 1], [], []>} : vector<16x32xf32>, vector<32x32xf32>, vector<16x32xf32> -> vector<16x32xf32>
    %c0_9 = arith.constant 0 : index
    %c0_10 = arith.constant 0 : index
    %23 = vector.load %arg3[%c0_9, %c0_10] : memref<1x32xf32, #tpu.memory_space<vmem>>, vector<1x32xf32>
    %24 = vector.broadcast %23 : vector<1x32xf32> to vector<16x32xf32>
    %25 = arith.addf %22, %24 : vector<16x32xf32>
    %cst_11 = arith.constant 0.000000e+00 : f32
    %26 = vector.broadcast %cst_11 : f32 to vector<16x32xf32>
    %27 = arith.maximumf %25, %26 : vector<16x32xf32>
    %c0_12 = arith.constant 0 : index
    %c0_13 = arith.constant 0 : index
    %28 = vector.load %arg4[%c0_12, %c0_13] : memref<16x32xf32, #tpu.memory_space<vmem>>, vector<16x32xf32>
    tpu.vector_store %arg4[%c0_12, %c0_13], %27 {strides = array<i32>} : memref<16x32xf32, #tpu.memory_space<vmem>>, vector<16x32xf32>,
    return
  }
  func.func @transform_0(%arg0: i32) -> (i32, i32) {
    %c0_i32 = arith.constant 0 : i32
    %c0_i32_0 = arith.constant 0 : i32
    return %arg0, %c0_i32 : i32, i32
  }
  func.func @transform_1(%arg0: i32) -> (i32, i32) {
    %c0_i32 = arith.constant 0 : i32
    %c0_i32_0 = arith.constant 0 : i32
    %c0_i32_1 = arith.constant 0 : i32
    return %c0_i32, %c0_i32_0 : i32, i32
  }
  func.func @transform_2(%arg0: i32) -> (i32, i32) {
    %c0_i32 = arith.constant 0 : i32
    %c0_i32_0 = arith.constant 0 : i32
    %c0_i32_1 = arith.constant 0 : i32
    return %c0_i32, %c0_i32_0 : i32, i32
  }
  func.func @transform_3(%arg0: i32) -> (i32, i32) {
    %c0_i32 = arith.constant 0 : i32
    %c0_i32_0 = arith.constant 0 : i32
    return %arg0, %c0_i32 : i32, i32
  }
}

</mosaic_0001>

<llo_original>
// kernel: tpu_custom_call.1
$region0: #{tpu_custom_call.1}
  #allocation0 [shape = 'u32[]', space=smem, size = 0x4, offset = 0x4, fixed_abs, tag = 'smem constant byte address 0x4 - core index']
  #allocation1 [shape = 'u32[144,128]{1,0:T(1,128)}', space=vmem, size = 0x12000, scoped, tag = 'internal scratch']
  %s0 = inlined_call_operand.hbm [shape: f32[16,32], index: 0, kind: input, shape index: {}]
  %s1 = inlined_call_operand.hbm [shape: f32[32,32], index: 1, kind: input, shape index: {}]
  %s2 = inlined_call_operand.vmem [shape: f32[1,32], index: 2, kind: input, shape index: {}]
  %s3 = inlined_call_operand.hbm [shape: f32[16,32], index: 3, kind: output, shape index: {}]
  %s4 = sld [smem:[#allocation0]]
  $region30: #{tpu_custom_call.1} parent=0
    _
  %s6 = ssub.s32 1, %s4
  %s7 = scalar_select 0, %s6, %s4
  $region1: #{tpu_custom_call.1} parent=0
    #allocation2 [shape = 'u8[8192]{0}', space=vmem, size = 0x2000, scoped, tag = 'input window, operand 0, single buffered']
    #allocation3 [shape = 's32[1]{0}', space=sflag, size = 0x4, scoped, tag = 'scoped memory for tpu_custom_call.1']
    #allocation4 [shape = 's32[1]{0}', space=sflag, size = 0x4, scoped, tag = 'scoped memory for tpu_custom_call.1']
    #allocation5 [shape = 'u8[16384]{0}', space=vmem, size = 0x4000, scoped, tag = 'input window, operand 1, single buffered']
    #allocation6 [shape = 's32[1]{0}', space=sflag, size = 0x4, scoped, tag = 'scoped memory for tpu_custom_call.1']
    #allocation7 [shape = 'u8[8192]{0}', space=vmem, size = 0x2000, scoped, tag = 'output window, operand 0, single buffered']
    %8 = vsyncpa [#allocation3], 0
    %9 = vsyncpa [#allocation6], 0
    %10 = vsyncpa [#allocation4], 0
    // Predicated region
    $region2: #{tpu_custom_call.1} parent=1 // pred_check
      _
    $region3: #{tpu_custom_call.1} parent=1 // pred_check_branch
      %12 = sbr.rel (0) target = $region5
    $region4: #{tpu_custom_call.1} parent=1 // pred_region
      %s14 = ssub.s32 256, 256
      %15 = vsyncadd [#allocation3], %s14
      %s16 = sshll.u32 [#allocation2], 4
      %s17 = int_to_ptr.vmem [resolvable:$true] %s16
      %22 = dma.hbm_to_vmem [thread:$0]  %s0, 256, %s17, [#allocation3], 128, 128, 8
    $region5: #{tpu_custom_call.1} parent=1 // pred_fallthru
      _
    // Predicated region
    $region6: #{tpu_custom_call.1} parent=1 // pred_check
      _
    $region7: #{tpu_custom_call.1} parent=1 // pred_check_branch
      %24 = sbr.rel (0) target = $region9
    $region8: #{tpu_custom_call.1} parent=1 // pred_region
      %s26 = ssub.s32 512, 512
      %27 = vsyncadd [#allocation6], %s26
      %s28 = sshll.u32 [#allocation5], 4
      %s29 = int_to_ptr.vmem [resolvable:$true] %s28
      %34 = dma.hbm_to_vmem [thread:$0]  %s1, 512, %s29, [#allocation6], 128, 128, 8
    $region9: #{tpu_custom_call.1} parent=1 // pred_fallthru
      _
    // Predicated region
    $region10: #{tpu_custom_call.1} parent=1 // pred_check
      _
    $region11: #{tpu_custom_call.1} parent=1 // pred_check_branch
      %36 = sbr.rel (0) target = $region13
    $region12: #{tpu_custom_call.1} parent=1 // pred_region
      _
    $region13: #{tpu_custom_call.1} parent=1 // pred_fallthru
      _
    // Predicated region
    $region14: #{tpu_custom_call.1} parent=1 // pred_check
      _
    $region15: #{tpu_custom_call.1} parent=1 // pred_check_branch
      %38 = sbr.rel (0) target = $region17
    $region16: #{tpu_custom_call.1} parent=1 // pred_region
      %39 = dma.done [#allocation3], 256
    $region17: #{tpu_custom_call.1} parent=1 // pred_fallthru
      _
    // Predicated region
    $region18: #{tpu_custom_call.1} parent=1 // pred_check
      _
    $region19: #{tpu_custom_call.1} parent=1 // pred_check_branch
      %41 = sbr.rel (0) target = $region21
    $region20: #{tpu_custom_call.1} parent=1 // pred_region
      %42 = dma.done [#allocation6], 512
    $region21: #{tpu_custom_call.1} parent=1 // pred_fallthru
      _
    %v43 = vld [vmem:[#allocation2] sm:$0xff]
    %v44 = vld [vmem:[#allocation2 + $0x8] sm:$0xff]
    %vm45 = vcmask 261120
    %v46 = vsel %vm45, %v43, 0.0
    %47 = vadd.xlane.f32.xlu0 %v46
    %v48 = vpop.xlane.xlu0 %47
    %v49 = vsel %vm45, %v44, 0.0
    %50 = vadd.xlane.f32.xlu0 %v49
    %v51 = vpop.xlane.xlu0 %50
    %v52 = vmul.f32 %v43, %v43
    %v53 = vmul.f32 %v44, %v44
    %v54 = vsel %vm45, %v52, 0.0
    %55 = vadd.xlane.f32.xlu0 %v54
    %v56 = vpop.xlane.xlu0 %55
    %v57 = vsel %vm45, %v53, 0.0
    %58 = vadd.xlane.f32.xlu0 %v57
    %v59 = vpop.xlane.xlu0 %58
    %v60 = vmul.f32 %v48, 0.03125
    %v61 = vmul.f32 %v51, 0.03125
    %v62 = vmul.f32 %v56, 0.03125
    %v63 = vmul.f32 %v59, 0.03125
    %v64 = vmul.f32 %v60, %v60
    %v65 = vmul.f32 %v61, %v61
    %v66 = vsub.f32 %v62, %v64
    %v67 = vsub.f32 %v63, %v65
    %v68 = vmax.f32 %v66, 0.0
    %v69 = vmax.f32 %v67, 0.0
    %v70 = vsub.f32 %v43, %v60
    %v71 = vsub.f32 %v44, %v61
    %v72 = vadd.f32 %v68, 1e-05
    %v73 = vadd.f32 %v69, 1e-05
    %v74 = vrsqrt.pop %v72
    %v75 = vrsqrt.pop %v73
    %v76 = vmul.f32 %v70, %v74
    %v77 = vmul.f32 %v71, %v75
    %v78 = vld [vmem:[#allocation5] sm:$0xff]
    %v79 = vld [vmem:[#allocation5 + $0x8] sm:$0xff]
    %v80 = vld [vmem:[#allocation5 + $0x10] sm:$0xff]
    %v81 = vld [vmem:[#allocation5 + $0x18] sm:$0xff]
    %v82 = vld [vmem:[%s2] sm:$0x1]
    %v84 = vlaneseq
    %v85 = vshrl.u32 %v84, 7
    %v86 = vsub.s32 0, %v85
    %v87 = vrot.slane %v82, %v86
    %v90 = vsel %vm45, %v76, 0
    %v93 = vsel %vm45, %v77, 0
    %95 = vmatprep.subr.mxu0 0.0
    %96 = vmatpush1.msra.mxu0 0.0
    %97 = vmatprep.subr.mxu0 0.0
    %98 = vmatpush1.msra.mxu0 0.0
    %99 = vmatprep.subr.mxu0 0.0
    %100 = vmatpush1.msra.mxu0 0.0
    %101 = vmatprep.subr.mxu0 0.0
    %102 = vmatpush1.msra.mxu0 0.0
    %103 = vmatprep.subr.mxu0 0.0
    %104 = vmatpush1.msra.mxu0 0.0
    %105 = vmatprep.subr.mxu0 0.0
    %106 = vmatpush1.msra.mxu0 0.0
    %107 = vmatprep.subr.mxu0 0.0
    %108 = vmatpush1.msra.mxu0 0.0
    %109 = vmatprep.subr.mxu0 0.0
    %110 = vmatpush1.msra.mxu0 0.0
    %111 = vmatprep.subr.mxu0 0.0
    %112 = vmatpush1.msra.mxu0 0.0
    %113 = vmatprep.subr.mxu0 0.0
    %114 = vmatpush1.msra.mxu0 0.0
    %115 = vmatprep.subr.mxu0 0.0
    %116 = vmatpush1.msra.mxu0 0.0
    %117 = vmatprep.subr.mxu0 0.0
    %118 = vmatpush1.msra.mxu0 0.0
    %119 = vmatprep.subr.mxu0 0.0
    %120 = vmatpush1.msra.mxu0 %v81
    %121 = vmatprep.subr.mxu0 0.0
    %122 = vmatpush1.msra.mxu0 %v80
    %123 = vmatprep.subr.mxu0 0.0
    %124 = vmatpush1.msra.mxu0 %v79
    %125 = vmatprep.subr.mxu0 0.0
    %126 = vmatpush1.msra.mxu0 %v78
    %127 = vmatprep.subr.mxu0 0.0
    %128 = vmatpush2.msra.mxu0 0.0
    %129 = vmatprep.subr.mxu0 0.0
    %130 = vmatpush2.msra.mxu0 0.0
    %131 = vmatprep.subr.mxu0 0.0
    %132 = vmatpush2.msra.mxu0 0.0
    %133 = vmatprep.subr.mxu0 0.0
    %134 = vmatpush2.msra.mxu0 0.0
    %135 = vmatprep.subr.mxu0 0.0
    %136 = vmatpush2.msra.mxu0 0.0
    %137 = vmatprep.subr.mxu0 0.0
    %138 = vmatpush2.msra.mxu0 0.0
    %139 = vmatprep.subr.mxu0 0.0
    %140 = vmatpush2.msra.mxu0 0.0
    %141 = vmatprep.subr.mxu0 0.0
    %142 = vmatpush2.msra.mxu0 0.0
    %143 = vmatprep.subr.mxu0 0.0
    %144 = vmatpush2.msra.mxu0 0.0
    %145 = vmatprep.subr.mxu0 0.0
    %146 = vmatpush2.msra.mxu0 0.0
    %147 = vmatprep.subr.mxu0 0.0
    %148 = vmatpush2.msra.mxu0 0.0
    %149 = vmatprep.subr.mxu0 0.0
    %150 = vmatpush2.msra.mxu0 0.0
    %151 = vmatprep.subr.mxu0 0.0
    %152 = vmatpush2.msra.mxu0 0.0
    %153 = vmatprep.subr.mxu0 0.0
    %154 = vmatpush2.msra.mxu0 0.0
    %155 = vmatprep.subr.mxu0 0.0
    %156 = vmatpush2.msra.mxu0 0.0
    %157 = vmatprep.subr.mxu0 0.0
    %158 = vmatpush2.msra.mxu0 0.0
    %159 = vmatprep.mubr.f32.mxu0 0.0
    %160 = vmatmul.mubr.f32.gmra.mxu0 %v90
    %v161 = vpop.f32.mrf.mxu0
    %v162 = vadd.f32 %v87, %v161
    %v163 = vpop.f32.mrf.mxu0
    %164 = vmatprep.mubr.f32.mxu0 0.0
    %165 = vmatmul.mubr.f32.gmra.mxu0 %v93
    %v166 = vpop.f32.mrf.mxu0
    %v167 = vadd.f32 %v87, %v166
    %v168 = vpop.f32.mrf.mxu0
    %169 = vdwg.mxu0
    %v170 = vmax.f32 %v162, 0.0
    %v171 = vmax.f32 %v167, 0.0
    %172 = vst.msk [vmem:[#allocation7] sm:$0xff] %vm45, %v170
    %173 = vst.msk [vmem:[#allocation7 + $0x8] sm:$0xff] %vm45, %v171
    // Predicated region
    $region22: #{tpu_custom_call.1} parent=1 // pred_check
      _
    $region23: #{tpu_custom_call.1} parent=1 // pred_check_branch
      %175 = sbr.rel (0) target = $region25
    $region24: #{tpu_custom_call.1} parent=1 // pred_region
      %s177 = ssub.s32 256, 256
      %178 = vsyncadd [#allocation4], %s177
      %s179 = sshll.u32 [#allocation7], 4
      %s180 = int_to_ptr.vmem [resolvable:$true] %s179
      %185 = dma.vmem_to_hbm [thread:$0]  %s180, 256, %s3, [#allocation4], 128, 128, 8
    $region25: #{tpu_custom_call.1} parent=1 // pred_fallthru
      _
    // Predicated region
    $region26: #{tpu_custom_call.1} parent=1 // pred_check
      _
    $region27: #{tpu_custom_call.1} parent=1 // pred_check_branch
      %187 = sbr.rel (0) target = $region29
    $region28: #{tpu_custom_call.1} parent=1 // pred_region
      %188 = dma.done [#allocation4], 256
    $region29: #{tpu_custom_call.1} parent=1 // pred_fallthru
      _
    %189 = vsyncpa [#allocation3], 1
    %190 = vsyncpa [#allocation6], 1
    %191 = vsyncpa [#allocation4], 1

// kernel: tpu_custom_call.1
$region0: #{tpu_custom_call.1}
  #allocation0 [shape = 'u32[]', space=smem, size = 0x4, offset = 0x4, fixed_abs, tag = 'smem constant byte address 0x4 - core index']
  #allocation1 [shape = 'u32[144,128]{1,0:T(1,128)}', space=vmem, size = 0x12000, scoped, tag = 'internal scratch']
  %s0 = inlined_call_operand.hbm [shape: f32[16,32], index: 0, kind: input, shape index: {}]
  %s1 = inlined_call_operand.hbm [shape: f32[32,32], index: 1, kind: input, shape index: {}]
  %s2 = inlined_call_operand.vmem [shape: f32[1,32], index: 2, kind: input, shape index: {}]
  %s3 = inlined_call_operand.hbm [shape: f32[16,32], index: 3, kind: output, shape index: {}]
  %s4 = sld [smem:[#allocation0]]
  $region30: #{tpu_custom_call.1} parent=0
    _
  %s6 = ssub.s32 1, %s4
  %s7 = scalar_select 0, %s6, %s4
  $region1: #{tpu_custom_call.1} parent=0
    #allocation2 [shape = 'u8[8192]{0}', space=vmem, size = 0x2000, scoped, tag = 'input window, operand 0, single buffered']
    #allocation3 [shape = 's32[1]{0}', space=sflag, size = 0x4, scoped, tag = 'scoped memory for tpu_custom_call.1']
    #allocation4 [shape = 's32[1]{0}', space=sflag, size = 0x4, scoped, tag = 'scoped memory for tpu_custom_call.1']
    #allocation5 [shape = 'u8[16384]{0}', space=vmem, size = 0x4000, scoped, tag = 'input window, operand 1, single buffered']
    #allocation6 [shape = 's32[1]{0}', space=sflag, size = 0x4, scoped, tag = 'scoped memory for tpu_custom_call.1']
    #allocation7 [shape = 'u8[8192]{0}', space=vmem, size = 0x2000, scoped, tag = 'output window, operand 0, single buffered']
    %8 = vsyncpa [#allocation3], 0
    %9 = vsyncpa [#allocation6], 0
    %10 = vsyncpa [#allocation4], 0
    // Predicated region
    $region2: #{tpu_custom_call.1} parent=1 // pred_check
      _
    $region3: #{tpu_custom_call.1} parent=1 // pred_check_branch
      %12 = sbr.rel (0) target = $region5
    $region4: #{tpu_custom_call.1} parent=1 // pred_region
      %s14 = ssub.s32 256, 256
      %15 = vsyncadd [#allocation3], %s14
      %s16 = sshll.u32 [#allocation2], 4
      %s17 = int_to_ptr.vmem [resolvable:$true] %s16
      %22 = dma.hbm_to_vmem [thread:$0]  %s0, 256, %s17, [#allocation3], 128, 128, 8
    $region5: #{tpu_custom_call.1} parent=1 // pred_fallthru
      _
    // Predicated region
    $region6: #{tpu_custom_call.1} parent=1 // pred_check
      _
    $region7: #{tpu_custom_call.1} parent=1 // pred_check_branch
      %24 = sbr.rel (0) target = $region9
    $region8: #{tpu_custom_call.1} parent=1 // pred_region
      %s26 = ssub.s32 512, 512
      %27 = vsyncadd [#allocation6], %s26
      %s28 = sshll.u32 [#allocation5], 4
      %s29 = int_to_ptr.vmem [resolvable:$true] %s28
      %34 = dma.hbm_to_vmem [thread:$0]  %s1, 512, %s29, [#allocation6], 128, 128, 8
    $region9: #{tpu_custom_call.1} parent=1 // pred_fallthru
      _
    // Predicated region
    $region10: #{tpu_custom_call.1} parent=1 // pred_check
      _
    $region11: #{tpu_custom_call.1} parent=1 // pred_check_branch
      %36 = sbr.rel (0) target = $region13
    $region12: #{tpu_custom_call.1} parent=1 // pred_region
      _
    $region13: #{tpu_custom_call.1} parent=1 // pred_fallthru
      _
    // Predicated region
    $region14: #{tpu_custom_call.1} parent=1 // pred_check
      _
    $region15: #{tpu_custom_call.1} parent=1 // pred_check_branch
      %38 = sbr.rel (0) target = $region17
    $region16: #{tpu_custom_call.1} parent=1 // pred_region
      %39 = dma.done [#allocation3], 256
    $region17: #{tpu_custom_call.1} parent=1 // pred_fallthru
      _
    // Predicated region
    $region18: #{tpu_custom_call.1} parent=1 // pred_check
      _
    $region19: #{tpu_custom_call.1} parent=1 // pred_check_branch
      %41 = sbr.rel (0) target = $region21
    $region20: #{tpu_custom_call.1} parent=1 // pred_region
      %42 = dma.done [#allocation6], 512
    $region21: #{tpu_custom_call.1} parent=1 // pred_fallthru
      _
    %v43 = vld [vmem:[#allocation2] sm:$0xff]
    %v44 = vld [vmem:[#allocation2 + $0x8] sm:$0xff]
    %vm45 = vcmask 261120
    %v46 = vsel %vm45, %v43, 0.0
    %47 = vadd.xlane.f32.xlu0 %v46
    %v48 = vpop.xlane.xlu0 %47
    %v49 = vsel %vm45, %v44, 0.0
    %50 = vadd.xlane.f32.xlu0 %v49
    %v51 = vpop.xlane.xlu0 %50
    %v52 = vmul.f32 %v43, %v43
    %v53 = vmul.f32 %v44, %v44
    %v54 = vsel %vm45, %v52, 0.0
    %55 = vadd.xlane.f32.xlu0 %v54
    %v56 = vpop.xlane.xlu0 %55
    %v57 = vsel %vm45, %v53, 0.0
    %58 = vadd.xlane.f32.xlu0 %v57
    %v59 = vpop.xlane.xlu0 %58
    %v60 = vmul.f32 %v48, 0.03125
    %v61 = vmul.f32 %v51, 0.03125
    %v62 = vmul.f32 %v56, 0.03125
    %v63 = vmul.f32 %v59, 0.03125
    %v64 = vmul.f32 %v60, %v60
    %v65 = vmul.f32 %v61, %v61
    %v66 = vsub.f32 %v62, %v64
    %v67 = vsub.f32 %v63, %v65
    %v68 = vmax.f32 %v66, 0.0
    %v69 = vmax.f32 %v67, 0.0
    %v70 = vsub.f32 %v43, %v60
    %v71 = vsub.f32 %v44, %v61
    %v72 = vadd.f32 %v68, 1e-05
    %v73 = vadd.f32 %v69, 1e-05
    %v74 = vrsqrt.pop %v72
    %v75 = vrsqrt.pop %v73
    %v76 = vmul.f32 %v70, %v74
    %v77 = vmul.f32 %v71, %v75
    %v78 = vld [vmem:[#allocation5] sm:$0xff]
    %v79 = vld [vmem:[#allocation5 + $0x8] sm:$0xff]
    %v80 = vld [vmem:[#allocation5 + $0x10] sm:$0xff]
    %v81 = vld [vmem:[#allocation5 + $0x18] sm:$0xff]
    %v82 = vld [vmem:[%s2] sm:$0x1]
    %v84 = vlaneseq
    %v85 = vshrl.u32 %v84, 7
    %v86 = vsub.s32 0, %v85
    %v87 = vrot.slane %v82, %v86
    %v90 = vsel %vm45, %v76, 0
    %v93 = vsel %vm45, %v77, 0
    %95 = vmatprep.subr.mxu0 0.0
    %96 = vmatpush1.msra.mxu0 0.0
    %97 = vmatprep.subr.mxu0 0.0
    %98 = vmatpush1.msra.mxu0 0.0
    %99 = vmatprep.subr.mxu0 0.0
    %100 = vmatpush1.msra.mxu0 0.0
    %101 = vmatprep.subr.mxu0 0.0
    %102 = vmatpush1.msra.mxu0 0.0
    %103 = vmatprep.subr.mxu0 0.0
    %104 = vmatpush1.msra.mxu0 0.0
    %105 = vmatprep.subr.mxu0 0.0
    %106 = vmatpush1.msra.mxu0 0.0
    %107 = vmatprep.subr.mxu0 0.0
    %108 = vmatpush1.msra.mxu0 0.0
    %109 = vmatprep.subr.mxu0 0.0
    %110 = vmatpush1.msra.mxu0 0.0
    %111 = vmatprep.subr.mxu0 0.0
    %112 = vmatpush1.msra.mxu0 0.0
    %113 = vmatprep.subr.mxu0 0.0
    %114 = vmatpush1.msra.mxu0 0.0
    %115 = vmatprep.subr.mxu0 0.0
    %116 = vmatpush1.msra.mxu0 0.0
    %117 = vmatprep.subr.mxu0 0.0
    %118 = vmatpush1.msra.mxu0 0.0
    %119 = vmatprep.subr.mxu0 0.0
    %120 = vmatpush1.msra.mxu0 %v81
    %121 = vmatprep.subr.mxu0 0.0
    %122 = vmatpush1.msra.mxu0 %v80
    %123 = vmatprep.subr.mxu0 0.0
    %124 = vmatpush1.msra.mxu0 %v79
    %125 = vmatprep.subr.mxu0 0.0
    %126 = vmatpush1.msra.mxu0 %v78
    %127 = vmatprep.subr.mxu0 0.0
    %128 = vmatpush2.msra.mxu0 0.0
    %129 = vmatprep.subr.mxu0 0.0
    %130 = vmatpush2.msra.mxu0 0.0
    %131 = vmatprep.subr.mxu0 0.0
    %132 = vmatpush2.msra.mxu0 0.0
    %133 = vmatprep.subr.mxu0 0.0
    %134 = vmatpush2.msra.mxu0 0.0
    %135 = vmatprep.subr.mxu0 0.0
    %136 = vmatpush2.msra.mxu0 0.0
    %137 = vmatprep.subr.mxu0 0.0
    %138 = vmatpush2.msra.mxu0 0.0
    %139 = vmatprep.subr.mxu0 0.0
    %140 = vmatpush2.msra.mxu0 0.0
    %141 = vmatprep.subr.mxu0 0.0
    %142 = vmatpush2.msra.mxu0 0.0
    %143 = vmatprep.subr.mxu0 0.0
    %144 = vmatpush2.msra.mxu0 0.0
    %145 = vmatprep.subr.mxu0 0.0
    %146 = vmatpush2.msra.mxu0 0.0
    %147 = vmatprep.subr.mxu0 0.0
    %148 = vmatpush2.msra.mxu0 0.0
    %149 = vmatprep.subr.mxu0 0.0
    %150 = vmatpush2.msra.mxu0 0.0
    %151 = vmatprep.subr.mxu0 0.0
    %152 = vmatpush2.msra.mxu0 0.0
    %153 = vmatprep.subr.mxu0 0.0
    %154 = vmatpush2.msra.mxu0 0.0
    %155 = vmatprep.subr.mxu0 0.0
    %156 = vmatpush2.msra.mxu0 0.0
    %157 = vmatprep.subr.mxu0 0.0
    %158 = vmatpush2.msra.mxu0 0.0
    %159 = vmatprep.mubr.f32.mxu0 0.0
    %160 = vmatmul.mubr.f32.gmra.mxu0 %v90
    %v161 = vpop.f32.mrf.mxu0
    %v162 = vadd.f32 %v87, %v161
    %v163 = vpop.f32.mrf.mxu0
    %164 = vmatprep.mubr.f32.mxu0 0.0
    %165 = vmatmul.mubr.f32.gmra.mxu0 %v93
    %v166 = vpop.f32.mrf.mxu0
    %v167 = vadd.f32 %v87, %v166
    %v168 = vpop.f32.mrf.mxu0
    %169 = vdwg.mxu0
    %v170 = vmax.f32 %v162, 0.0
    %v171 = vmax.f32 %v167, 0.0
    %172 = vst.msk [vmem:[#allocation7] sm:$0xff] %vm45, %v170
    %173 = vst.msk [vmem:[#allocation7 + $0x8] sm:$0xff] %vm45, %v171
    // Predicated region
    $region22: #{tpu_custom_call.1} parent=1 // pred_check
      _
    $region23: #{tpu_custom_call.1} parent=1 // pred_check_branch
      %175 = sbr.rel (0) target = $region25
    $region24: #{tpu_custom_call.1} parent=1 // pred_region
      %s177 = ssub.s32 256, 256
      %178 = vsyncadd [#allocation4], %s177
      %s179 = sshll.u32 [#allocation7], 4
      %s180 = int_to_ptr.vmem [resolvable:$true] %s179
      %185 = dma.vmem_to_hbm [thread:$0]  %s180, 256, %s3, [#allocation4], 128, 128, 8
    $region25: #{tpu_custom_call.1} parent=1 // pred_fallthru
      _
    // Predicated region
    $region26: #{tpu_custom_call.1} parent=1 // pred_check
      _
    $region27: #{tpu_custom_call.1} parent=1 // pred_check_branch
      %187 = sbr.rel (0) target = $region29
    $region28: #{tpu_custom_call.1} parent=1 // pred_region
      %188 = dma.done [#allocation4], 256
    $region29: #{tpu_custom_call.1} parent=1 // pred_fallthru
      _
    %189 = vsyncpa [#allocation3], 1
    %190 = vsyncpa [#allocation6], 1
    %191 = vsyncpa [#allocation4], 1

</llo_original>
